<compile_context>
chip_gen: v7x
topology: tpu7x:2x2x1
jax: 0.10.0
libtpu: 0.0.40
codegen_flags: <defaults>
</compile_context>

<pallas_src>
import functools

import jax
import jax.numpy as jnp
from jax.experimental import pallas as pl
from jax.experimental.pallas import tpu as pltpu

LAMBDA = 150.0
SMOOTH_PREFIX = 6  # gru_outputs[:6]


def _round_up(x: int, m: int) -> int:
    return ((x + m - 1) // m) * m


def _round_down(x: int, m: int) -> int:
    return (x // m) * m


# ---------------------------------------------------------------------------
# Single-sequence kernel (matches the PyTorch module's forward signature).
# ---------------------------------------------------------------------------
def _rhythmnet_loss_single_kernel(g_ref, t_ref, out_ref, *, inv_n, inv_k, k):
    # g_ref / t_ref: (1, N) VMEM blocks.  out_ref: (1, 1) scalar in SMEM.
    g = g_ref[...].astype(jnp.float32)
    t = t_ref[...].astype(jnp.float32)

    # Full-width pass: only the L1 term has to touch all N elements.
    l1 = jnp.sum(jnp.abs(g - t)) * inv_n

    # Smooth term only ever reads the first k = min(6, N) elements.
    g_pref = g[:, :k]                                   # (1, k) static slice
    x_mean = jnp.sum(g_pref) * inv_k
    smooth = jnp.sum(jnp.abs(g_pref - x_mean)) * inv_k

    out_ref[0, 0] = l1 + LAMBDA * smooth


def rhythmnet_loss(gru_outputs: jax.Array, target: jax.Array) -> jax.Array:
    """gru_outputs, target: shape (seq,). Returns shape (1,) float32."""
    assert gru_outputs.shape == target.shape and gru_outputs.ndim == 1
    n = gru_outputs.shape[0]
    k = min(SMOOTH_PREFIX, n)

    # Free metadata reshapes (no HBM copies, no dtype casts in the wrapper).
    g2 = gru_outputs.reshape(1, n)
    t2 = target.reshape(1, n)

    kernel = functools.partial(
        _rhythmnet_loss_single_kernel, inv_n=1.0 / n, inv_k=1.0 / k, k=k)
    out = pl.pallas_call(
        kernel,
        out_shape=jax.ShapeDtypeStruct((1, 1), jnp.float32),
        in_specs=[pl.BlockSpec((1, n), lambda: (0, 0)),
                  pl.BlockSpec((1, n), lambda: (0, 0))],
        out_specs=pl.BlockSpec(memory_space=pltpu.MemorySpace.SMEM),
    )(g2, t2)
    return out.reshape(1)


# ---------------------------------------------------------------------------
# Batched kernel: one pallas_call computes B per-sequence losses.
# ---------------------------------------------------------------------------
def _rhythmnet_loss_batched_kernel(g_ref, t_ref, out_ref, *, inv_n, inv_k, k):
    # g_ref / t_ref: (TB, N) VMEM blocks.  out_ref: (1, 1, TB) VMEM block.
    g = g_ref[...].astype(jnp.float32)
    t = t_ref[...].astype(jnp.float32)
    tb = g.shape[0]

    # Full-width pass (the only one that touches all N columns).
    l1 = jnp.sum(jnp.abs(g - t), axis=-1, keepdims=True) * inv_n          # (TB, 1)

    # Smooth term restricted to the static k = min(6, N) prefix.
    g_pref = g[:, :k]                                                     # (TB, k)
    x_mean = jnp.sum(g_pref, axis=-1, keepdims=True) * inv_k              # (TB, 1)
    smooth = jnp.sum(jnp.abs(g_pref - x_mean), axis=-1, keepdims=True) * inv_k

    loss = l1 + LAMBDA * smooth                                           # (TB, 1)
    # Lane-dense writeback: (TB, 1) column -> (1, TB) row (small XLU relayout,
    # avoids TB masked single-lane stores).
    out_ref[...] = jnp.transpose(loss, (1, 0)).reshape(1, 1, tb)


def _pick_tile_b(b: int, n: int, itemsize: int,
                 block_budget_bytes: int = 2 << 20) -> int:
    # Largest sublane-aligned row tile whose per-input block stays within the
    # byte budget.  Worst case 2 inputs x 2 buffers x 2 MiB = 8 MiB, inside
    # v5e's 16 MiB scoped-VMEM default (trivially fine on v6e/v7x).
    rows = max(8, _round_down(block_budget_bytes // max(n * itemsize, 1), 8))
    if rows >= b:
        if b >= 16:
            # Keep >= 2 grid steps so the "parallel" batch axis can shard
            # across v7x's two TensorCores.
            return _round_up((b + 1) // 2, 8)
        return b  # single block covering the whole (tiny) batch exactly
    return rows


def rhythmnet_loss_batched(gru_outputs: jax.Array, target: jax.Array,
                           *, tile_b=None) -> jax.Array:
    """gru_outputs, target: shape (B, seq). Returns per-sequence losses, shape (B,)."""
    assert gru_outputs.shape == target.shape and gru_outputs.ndim == 2
    b, n = gru_outputs.shape
    k = min(SMOOTH_PREFIX, n)

    itemsize = max(gru_outputs.dtype.itemsize, target.dtype.itemsize)
    if tile_b is None:
        tile_b = _pick_tile_b(b, n, itemsize)
    else:
        tile_b = int(tile_b)
        tile_b = b if tile_b >= b else max(8, _round_down(tile_b, 8))
    num_tiles = pl.cdiv(b, tile_b)

    kernel = functools.partial(
        _rhythmnet_loss_batched_kernel, inv_n=1.0 / n, inv_k=1.0 / k, k=k)
    out = pl.pallas_call(
        kernel,
        out_shape=jax.ShapeDtypeStruct((num_tiles, 1, tile_b), jnp.float32),
        grid=(num_tiles,),
        in_specs=[pl.BlockSpec((tile_b, n), lambda i: (i, 0)),
                  pl.BlockSpec((tile_b, n), lambda i: (i, 0))],
        out_specs=pl.BlockSpec((1, 1, tile_b), lambda i: (i, 0, 0)),
        compiler_params=pltpu.CompilerParams(
            dimension_semantics=("parallel",)),
    )(gru_outputs, target)
    # Positions past B come from the ragged last block (undefined inputs);
    # rows are independent, so simply slice them off.
    return out.reshape(-1)[:b]


# ---------------------------------------------------------------------------
# Pure-JAX reference mirroring the PyTorch forward.
# ---------------------------------------------------------------------------
def rhythmnet_loss_ref(gru_outputs, target):
    g = gru_outputs.astype(jnp.float32)
    t = target.astype(jnp.float32)
    l1 = jnp.mean(jnp.abs(g - t))
    x = g[:SMOOTH_PREFIX].flatten()
    smooth = jnp.mean(jnp.abs(x - jnp.mean(x)))
    return (l1 + LAMBDA * smooth).reshape(1)


if __name__ == "__main__":
    key = jax.random.PRNGKey(0)
    k1, k2, k3, k4 = jax.random.split(key, 4)

    # --- single sequence (same signature as the PyTorch module) ---
    seq = 8
    gru_outputs = jax.random.normal(k1, (seq,), dtype=jnp.float32) * 10.0 + 70.0
    target = jax.random.normal(k2, (seq,), dtype=jnp.float32) * 10.0 + 70.0

    loss = rhythmnet_loss(gru_outputs, target)
    jax.block_until_ready(loss)
    ref = rhythmnet_loss_ref(gru_outputs, target)
    assert jnp.allclose(loss, ref, rtol=1e-5, atol=1e-5), (loss, ref)

    # --- batched: many per-video losses in one pallas_call ---
    batch = 2
    g_b = jax.random.normal(k3, (batch, seq), dtype=jnp.float32) * 10.0 + 70.0
    t_b = jax.random.normal(k4, (batch, seq), dtype=jnp.float32) * 10.0 + 70.0

    loss_b = rhythmnet_loss_batched(g_b, t_b)
    jax.block_until_ready(loss_b)
    ref_b = jnp.stack([rhythmnet_loss_ref(g_b[i], t_b[i])[0] for i in range(batch)])
    assert jnp.allclose(loss_b, ref_b, rtol=1e-5, atol=1e-5), (loss_b, ref_b)

    # --- exercise a multi-step grid with a ragged last block ---
    batch2 = 20
    g_c = jax.random.normal(k3, (batch2, seq), dtype=jnp.float32) * 10.0 + 70.0
    t_c = jax.random.normal(k4, (batch2, seq), dtype=jnp.float32) * 10.0 + 70.0

    loss_c = rhythmnet_loss_batched(g_c, t_c, tile_b=8)   # grid=(3,), ragged tail
    jax.block_until_ready(loss_c)
    ref_c = jnp.stack([rhythmnet_loss_ref(g_c[i], t_c[i])[0] for i in range(batch2)])
    assert jnp.allclose(loss_c, ref_c, rtol=1e-5, atol=1e-5), (loss_c, ref_c)

    print("KERNEL_OK")
</pallas_src>

<mosaic_0001>
module attributes {stable_mosaic.version = 11 : i64} {
  func.func @_rhythmnet_loss_single_kernel(%arg0: memref<1x8xf32, #tpu.memory_space<vmem>>, %arg1: memref<1x8xf32, #tpu.memory_space<vmem>>, %arg2: memref<1x1xf32, #tpu.memory_space<smem>>) attributes {dimension_semantics = [], scalar_prefetch = 0 : i64, scratch_operands = 0 : i64, tpu.core_type = #tpu.core_type<tc>} {
    %c0 = arith.constant 0 : index
    %c0_0 = arith.constant 0 : index
    %0 = vector.load %arg0[%c0, %c0_0] : memref<1x8xf32, #tpu.memory_space<vmem>>, vector<1x8xf32>
    %c0_1 = arith.constant 0 : index
    %c0_2 = arith.constant 0 : index
    %1 = vector.load %arg1[%c0_1, %c0_2] : memref<1x8xf32, #tpu.memory_space<vmem>>, vector<1x8xf32>
    %2 = arith.subf %0, %1 : vector<1x8xf32>
    %3 = math.absf %2 : vector<1x8xf32>
    %4 = vector.shape_cast %3 : vector<1x8xf32> to vector<1x1x8xf32>
    %cst = arith.constant dense<0.000000e+00> : vector<1xf32>
    %5 = vector.multi_reduction <add>, %4, %cst [1, 2] : vector<1x1x8xf32> to vector<1xf32>
    %6 = vector.shape_cast %5 : vector<1xf32> to vector<1x1x1xf32>
    %7 = vector.extract %6[0, 0, 0] : f32 from vector<1x1x1xf32>
    %cst_3 = arith.constant 1.250000e-01 : f32
    %8 = arith.mulf %7, %cst_3 : f32
    %9 = vector.extract_strided_slice %0 {offsets = [0, 0], sizes = [1, 6], strides = [1, 1]} : vector<1x8xf32> to vector<1x6xf32>
    %10 = vector.shape_cast %9 : vector<1x6xf32> to vector<1x1x6xf32>
    %cst_4 = arith.constant dense<0.000000e+00> : vector<1xf32>
    %11 = vector.multi_reduction <add>, %10, %cst_4 [1, 2] : vector<1x1x6xf32> to vector<1xf32>
    %12 = vector.shape_cast %11 : vector<1xf32> to vector<1x1x1xf32>
    %13 = vector.extract %12[0, 0, 0] : f32 from vector<1x1x1xf32>
    %cst_5 = arith.constant 0.166666672 : f32
    %14 = arith.mulf %13, %cst_5 : f32
    %15 = vector.broadcast %14 : f32 to vector<1x6xf32>
    %16 = arith.subf %9, %15 : vector<1x6xf32>
    %17 = math.absf %16 : vector<1x6xf32>
    %18 = vector.shape_cast %17 : vector<1x6xf32> to vector<1x1x6xf32>
    %cst_6 = arith.constant dense<0.000000e+00> : vector<1xf32>
    %19 = vector.multi_reduction <add>, %18, %cst_6 [1, 2] : vector<1x1x6xf32> to vector<1xf32>
    %20 = vector.shape_cast %19 : vector<1xf32> to vector<1x1x1xf32>
    %21 = vector.extract %20[0, 0, 0] : f32 from vector<1x1x1xf32>
    %cst_7 = arith.constant 0.166666672 : f32
    %22 = arith.mulf %21, %cst_7 : f32
    %cst_8 = arith.constant 1.500000e+02 : f32
    %23 = arith.mulf %cst_8, %22 : f32
    %24 = arith.addf %8, %23 : f32
    %c0_9 = arith.constant 0 : index
    %c0_10 = arith.constant 0 : index
    %25 = memref.load %arg2[%c0_9, %c0_10] : memref<1x1xf32, #tpu.memory_space<smem>>
    memref.store %24, %arg2[%c0_9, %c0_10] : memref<1x1xf32, #tpu.memory_space<smem>>
    return
  }
}

</mosaic_0001>

<llo_original>
// kernel: tpu_custom_call.1
$region0: #{tpu_custom_call.1}
  #allocation0 [shape = 'u32[]', space=smem, size = 0x4, offset = 0x4, fixed_abs, tag = 'smem constant byte address 0x4 - core index']
  #allocation1 [shape = 'u32[144,128]{1,0:T(1,128)}', space=vmem, size = 0x12000, scoped, tag = 'internal scratch']
  %s0 = inlined_call_operand.hbm [shape: f32[1,8], index: 0, kind: input, shape index: {}]
  %s1 = inlined_call_operand.vmem [shape: f32[1,8], index: 1, kind: input, shape index: {}]
  %s2 = inlined_call_operand.hbm [shape: f32[1,1], index: 2, kind: output, shape index: {}]
  %s3 = sld [smem:[#allocation0]]
  $region22: #{tpu_custom_call.1} parent=0
    _
  %s5 = ssub.s32 1, %s3
  %s6 = scalar_select 0, %s5, %s3
  $region1: #{tpu_custom_call.1} parent=0
    #allocation2 [shape = 'u8[512]{0}', space=vmem, size = 0x400, scoped, tag = 'input window, operand 0, single buffered']
    #allocation3 [shape = 's32[1]{0}', space=sflag, size = 0x4, scoped, tag = 'scoped memory for tpu_custom_call.1']
    #allocation4 [shape = 's32[1]{0}', space=sflag, size = 0x4, scoped, tag = 'scoped memory for tpu_custom_call.1']
    #allocation5 [shape = 'u8[512]{0}', space=smem, size = 0x200, scoped, tag = 'output window, operand 0, single buffered']
    %7 = vsyncpa [#allocation3], 0
    %8 = vsyncpa [#allocation4], 0
    // Predicated region
    $region2: #{tpu_custom_call.1} parent=1 // pred_check
      _
    $region3: #{tpu_custom_call.1} parent=1 // pred_check_branch
      %10 = sbr.rel (0) target = $region5
    $region4: #{tpu_custom_call.1} parent=1 // pred_region
      %s12 = ssub.s32 16, 16
      %13 = vsyncadd [#allocation3], %s12
      %s15 = sshll.u32 [#allocation2], 4
      %s16 = int_to_ptr.vmem [resolvable:$true] %s15
      %18 = dma.hbm_to_vmem [thread:$0]  %s0, 16, %s16, [#allocation3]
    $region5: #{tpu_custom_call.1} parent=1 // pred_fallthru
      _
    // Predicated region
    $region6: #{tpu_custom_call.1} parent=1 // pred_check
      _
    $region7: #{tpu_custom_call.1} parent=1 // pred_check_branch
      %20 = sbr.rel (0) target = $region9
    $region8: #{tpu_custom_call.1} parent=1 // pred_region
      _
    $region9: #{tpu_custom_call.1} parent=1 // pred_fallthru
      _
    // Predicated region
    $region10: #{tpu_custom_call.1} parent=1 // pred_check
      _
    $region11: #{tpu_custom_call.1} parent=1 // pred_check_branch
      %22 = sbr.rel (0) target = $region13
    $region12: #{tpu_custom_call.1} parent=1 // pred_region
      %23 = dma.done [#allocation3], 16
    $region13: #{tpu_custom_call.1} parent=1 // pred_fallthru
      _
    %v24 = vld [vmem:[#allocation2] sm:$0x1]
    %v25 = vld [vmem:[%s1] sm:$0x1]
    %v26 = vsub.f32 %v24, %v25
    %v27 = vand.u32 2147483647, %v26
    %vm28 = vcmask 57344
    %v29 = vsel %vm28, %v27, 0.0
    %30 = vadd.xlane.f32.xlu0 %v29
    %v31 = vpop.xlane.xlu0 %30
    %v32 = vrot.slane %v31, 4
    %v33 = vadd.f32 %v31, %v32
    %v34 = vrot.slane %v33, 2
    %v35 = vadd.f32 %v33, %v34
    %v36 = vrot.slane %v35, 1
    %v37 = vadd.f32 %v35, %v36
    %s38 = vtos %v37
    %s39 = smul.f32 %s38, 0.125
    %vm40 = vcmask 40960
    %v41 = vsel %vm40, %v24, 0.0
    %42 = vadd.xlane.f32.xlu0 %v41
    %v43 = vpop.xlane.xlu0 %42
    %v44 = vrot.slane %v43, 4
    %v45 = vadd.f32 %v43, %v44
    %v46 = vrot.slane %v45, 2
    %v47 = vadd.f32 %v45, %v46
    %v48 = vrot.slane %v47, 1
    %v49 = vadd.f32 %v47, %v48
    %s50 = vtos %v49
    %s51 = smul.f32 %s50, 0.16666667
    %v52 = vstv %s51
    %v53 = vsub.f32 %v24, %v52
    %v54 = vand.u32 2147483647, %v53
    %v55 = vsel %vm40, %v54, 0.0
    %56 = vadd.xlane.f32.xlu0 %v55
    %v57 = vpop.xlane.xlu0 %56
    %v58 = vrot.slane %v57, 4
    %v59 = vadd.f32 %v57, %v58
    %v60 = vrot.slane %v59, 2
    %v61 = vadd.f32 %v59, %v60
    %v62 = vrot.slane %v61, 1
    %v63 = vadd.f32 %v61, %v62
    %s64 = vtos %v63
    %s65 = smul.f32 %s64, 0.16666667
    %s66 = smul.f32 %s65, 150.0
    %s67 = sadd.f32 %s39, %s66
    %s68 = scalar_lea.smem [#allocation5], 0
    %69 = sst [smem:[%s68]] %s67
    // Predicated region
    $region14: #{tpu_custom_call.1} parent=1 // pred_check
      _
    $region15: #{tpu_custom_call.1} parent=1 // pred_check_branch
      %71 = sbr.rel (0) target = $region17
    $region16: #{tpu_custom_call.1} parent=1 // pred_region
      %s73 = ssub.s32 16, 16
      %74 = vsyncadd [#allocation4], %s73
      %77 = dma.smem_to_hbm [#allocation5], 16, %s2, [#allocation4]
    $region17: #{tpu_custom_call.1} parent=1 // pred_fallthru
      _
    // Predicated region
    $region18: #{tpu_custom_call.1} parent=1 // pred_check
      _
    $region19: #{tpu_custom_call.1} parent=1 // pred_check_branch
      %79 = sbr.rel (0) target = $region21
    $region20: #{tpu_custom_call.1} parent=1 // pred_region
      %80 = dma.done [#allocation4], 16
    $region21: #{tpu_custom_call.1} parent=1 // pred_fallthru
      _
    %81 = sfence
    %82 = vsyncpa [#allocation3], 1
    %83 = vsyncpa [#allocation4], 1

</llo_original>
